<compile_context>
chip_gen: v6e
topology: v6e:2x2x1
jax: 0.10.0
libtpu: 0.0.40
codegen_flags: <defaults>
</compile_context>

<pallas_src>
import jax
import jax.numpy as jnp
from jax.experimental import pallas as pl
from jax.experimental.pallas import tpu as pltpu


def _attn_pool2_kernel(x_ref, w1_ref, b1_ref, w2_ref, o_ref):
    # x_ref:  (TB, S, H)   bf16 or f32
    # w1_ref: (H, H2)      bf16 fc1 weight (transposed vs. torch)
    # b1_ref: (1, H2)      f32 fc1 bias
    # w2_ref: (1, H2)      f32 fc2 weight row
    # o_ref:  (TB, H)
    tb, s, hdim = x_ref.shape

    # fc1 + tanh on the MXU: bf16 inputs, f32 accumulation, M = TB*S.
    x2d = x_ref[...].reshape(tb * s, hdim)
    h = jnp.dot(x2d.astype(jnp.bfloat16), w1_ref[...],
                preferred_element_type=jnp.float32) + b1_ref[...]   # (TB*S, H2)
    h = jnp.tanh(h)
    # TODO(synk): dropout with rate > 0 (train mode) is not implemented here.

    # fc2 as a lane reduction (H2 is small).  b2 is omitted: adding a scalar
    # to every logit before a softmax is a mathematical no-op.
    logits = jnp.sum(h.reshape(tb, s, -1) * w2_ref[...], axis=-1)   # (TB, S)

    # Numerically-stable softmax over the sequence axis.
    m = jnp.max(logits, axis=-1, keepdims=True)                     # (TB, 1)
    e = jnp.exp(logits - m)                                         # (TB, S)
    att = e * pl.reciprocal(jnp.sum(e, axis=-1, keepdims=True), approx=True)

    # Attention-weighted pooling over S: VPU broadcast-multiply + XLU sublane
    # reduce.  x is re-read from VMEM here so the full block is not kept live
    # across fc1/tanh/softmax (shorter vreg live ranges, fewer spills).
    xw = x_ref[...].astype(jnp.float32) * att[:, :, None]           # (TB, S, H)
    o_ref[...] = jnp.sum(xw, axis=1).astype(o_ref.dtype)            # (TB, H)


def _vmem_budget_bytes():
    """~70% of physical VMEM (leaves Mosaic scratch / output-buffer headroom;
    critical on v7x where a TensorCore only has 64 MiB)."""
    try:
        phys = int(pltpu.get_tpu_info().vmem_capacity_bytes)
    except Exception:
        phys = 64 * 1024 * 1024            # conservative (v7x per-TC)
    return int(phys * 0.7)


def _select_tiling(batch, s, h, x_itemsize, vmem_budget,
                   target_x_block_bytes=4 << 20):
    """Pick (tb, padded_batch): batch rows per grid step and padded batch.

    tb is sized so the x block approaches the multi-MB range (amortizes the
    ~0.35 us per-grid-step overhead and fattens DMAs), stays inside the VMEM
    budget with double buffering, is a multiple of 8 (sublane-friendly), and
    leaves >= 2 grid steps so both v7x TensorCores get work.
    """
    per_row_x = s * h * x_itemsize
    # double-buffered x input + double-buffered f32 output + in-kernel
    # temporaries (fc1 activations, logits, attention, pooled rows).
    per_row_all = 2 * per_row_x + 2 * h * 4 + s * max(h // 2, 1) * 4 + (s + h) * 4
    tb_vmem = max(8, int(vmem_budget * 0.8) // max(per_row_all, 1))
    tb_tgt = max(8, target_x_block_bytes // max(per_row_x, 1))
    tb_max = min(tb_vmem, tb_tgt)

    if batch <= 8:
        return batch, batch                 # one block == full array dims

    # Keep >= 2 grid steps for megacore / pipelining.
    tb_max = min(tb_max, max(8, batch // 2))
    tb_max = max(8, (tb_max // 8) * 8)      # multiple of 8

    # Prefer the largest multiple-of-8 divisor of batch (no padding copy).
    for tb in range(tb_max, 7, -8):
        if batch % tb == 0:
            return tb, batch

    # Otherwise pad the batch up to a multiple of tb_max.
    tb = tb_max
    padded = ((batch + tb - 1) // tb) * tb
    return tb, padded


def attention_pooling2(x, w1, b1, w2, b2=None, *, tb=None, cast_x_to_bf16=True):
    """x: (B, S, H); returns (B, H) in x's original dtype.

    w1: (H, H//2), b1: (1, H//2), w2: (1, H//2).  b2 is accepted for API
    parity but unused: softmax is shift-invariant, so fc2's bias cannot
    change the output.  cast_x_to_bf16 halves HBM traffic on the dominant
    x read (fc1 already runs in bf16 on the MXU; pooling accumulates in f32).
    """
    del b2
    B, S, H = x.shape
    H2 = w1.shape[1]
    out_dtype = x.dtype

    if cast_x_to_bf16 and x.dtype == jnp.float32:
        x = x.astype(jnp.bfloat16)
    # Pre-cast weights once in the wrapper (not per grid step inside kernel).
    w1 = w1.astype(jnp.bfloat16)
    b1 = b1.astype(jnp.float32)
    w2 = w2.astype(jnp.float32)

    vmem_budget = _vmem_budget_bytes()
    if tb is None:
        tb, b_pad = _select_tiling(B, S, H, jnp.dtype(x.dtype).itemsize,
                                   vmem_budget)
    else:
        b_pad = ((B + tb - 1) // tb) * tb
    if b_pad != B:
        x = jnp.pad(x, ((0, b_pad - B), (0, 0), (0, 0)))

    out = pl.pallas_call(
        _attn_pool2_kernel,
        out_shape=jax.ShapeDtypeStruct((b_pad, H), out_dtype),
        grid_spec=pltpu.PrefetchScalarGridSpec(
            num_scalar_prefetch=0,
            grid=(b_pad // tb,),
            in_specs=[
                pl.BlockSpec((tb, S, H), lambda b: (b, 0, 0)),
                pl.BlockSpec((H, H2), lambda b: (0, 0)),
                pl.BlockSpec((1, H2), lambda b: (0, 0)),
                pl.BlockSpec((1, H2), lambda b: (0, 0)),
            ],
            out_specs=pl.BlockSpec((tb, H), lambda b: (b, 0)),
        ),
        compiler_params=pltpu.CompilerParams(
            dimension_semantics=("parallel",),
            vmem_limit_bytes=vmem_budget,
        ),
    )(x, w1, b1, w2)
    return out[:B] if b_pad != B else out


def _reference(x, w1, b1, w2, b2):
    # Plain-JAX (f32) mirror of the PyTorch forward (eval mode), b2 included.
    h = jnp.tanh(jnp.einsum("bsh,hk->bsk", x, w1) + b1[None])          # (B, S, H2)
    logits = jnp.einsum("bsk,k->bs", h, w2[0])[..., None] + b2[0, 0]   # (B, S, 1)
    att = jax.nn.softmax(logits, axis=1)
    return jnp.sum(x * att, axis=1)                                    # (B, H)


if __name__ == "__main__":
    B, S, H = 16, 8, 32
    H2 = H // 2

    key = jax.random.PRNGKey(0)
    kx, kw1, kb1, kw2, kb2 = jax.random.split(key, 5)

    x = jax.random.normal(kx, (B, S, H), dtype=jnp.float32)

    # Deterministic parameter init (mimics nn.Linear's uniform(-1/sqrt(fan_in), ...)).
    lim1 = 1.0 / jnp.sqrt(H)
    w1 = jax.random.uniform(kw1, (H, H2), jnp.float32, -lim1, lim1)
    b1 = jax.random.uniform(kb1, (1, H2), jnp.float32, -lim1, lim1)
    lim2 = 1.0 / jnp.sqrt(H2)
    w2 = jax.random.uniform(kw2, (1, H2), jnp.float32, -lim2, lim2)
    b2 = jax.random.uniform(kb2, (1, 1), jnp.float32, -lim2, lim2)

    ref = _reference(x, w1, b1, w2, b2)

    # 1) f32 x path (fc1 still bf16 on the MXU) -> auto tiling picks tb=8, grid=2.
    out_f32 = jax.block_until_ready(
        attention_pooling2(x, w1, b1, w2, b2, cast_x_to_bf16=False))
    assert out_f32.shape == (B, H)
    assert jnp.allclose(out_f32, ref, atol=2e-2, rtol=2e-2), "f32-x mismatch"

    # 2) bf16 x path (default; halves HBM traffic) -> looser tolerance.
    out_bf16 = jax.block_until_ready(attention_pooling2(x, w1, b1, w2, b2))
    assert out_bf16.shape == (B, H)
    assert jnp.allclose(out_bf16, ref, atol=8e-2, rtol=8e-2), "bf16-x mismatch"

    # 3) Non-divisible batch exercises the padding path (tb=8, padded to 16).
    Bo = 12
    xo = jax.random.normal(jax.random.PRNGKey(1), (Bo, S, H), dtype=jnp.float32)
    out_odd = jax.block_until_ready(
        attention_pooling2(xo, w1, b1, w2, b2, cast_x_to_bf16=False))
    ref_odd = _reference(xo, w1, b1, w2, b2)
    assert out_odd.shape == (Bo, H)
    assert jnp.allclose(out_odd, ref_odd, atol=2e-2, rtol=2e-2), "padded mismatch"

    print("KERNEL_OK")
</pallas_src>

<mosaic_0001>
module attributes {stable_mosaic.version = 11 : i64} {
  func.func @_attn_pool2_kernel(%arg0: i32, %arg1: memref<8x8x32xf32, #tpu.memory_space<vmem>>, %arg2: memref<32x16xbf16, #tpu.memory_space<vmem>>, %arg3: memref<1x16xf32, #tpu.memory_space<vmem>>, %arg4: memref<1x16xf32, #tpu.memory_space<vmem>>, %arg5: memref<8x32xf32, #tpu.memory_space<vmem>>) attributes {dimension_semantics = [#tpu.dimension_semantics<parallel>], iteration_bounds = array<i64: 2>, scalar_prefetch = 0 : i64, scratch_operands = 0 : i64, tpu.core_type = #tpu.core_type<tc>, window_params = [{transform_indices = @transform_0, window_bounds = array<i64: 8, 8, 32>}, {pipeline_mode = #tpu.pipeline_mode<synchronous>, transform_indices = @transform_1, window_bounds = array<i64: 32, 16>}, {pipeline_mode = #tpu.pipeline_mode<synchronous>, transform_indices = @transform_2, window_bounds = array<i64: 1, 16>}, {pipeline_mode = #tpu.pipeline_mode<synchronous>, transform_indices = @transform_3, window_bounds = array<i64: 1, 16>}, {transform_indices = @transform_4, window_bounds = array<i64: 8, 32>}]} {
    %c0 = arith.constant 0 : index
    %c0_0 = arith.constant 0 : index
    %c0_1 = arith.constant 0 : index
    %0 = vector.load %arg1[%c0, %c0_0, %c0_1] : memref<8x8x32xf32, #tpu.memory_space<vmem>>, vector<8x8x32xf32>
    %1 = vector.shape_cast %0 : vector<8x8x32xf32> to vector<64x32xf32>
    %2 = arith.truncf %1 : vector<64x32xf32> to vector<64x32xbf16>
    %c0_2 = arith.constant 0 : index
    %c0_3 = arith.constant 0 : index
    %3 = vector.load %arg2[%c0_2, %c0_3] : memref<32x16xbf16, #tpu.memory_space<vmem>>, vector<32x16xbf16>
    %cst = arith.constant dense<0.000000e+00> : vector<64x16xf32>
    %4 = tpu.matmul %2, %3, %cst {dimension_numbers = #tpu.dot_dimension_numbers<[1], [0], [0], [1], [0, 0, 1, 1], [], []>} : vector<64x32xbf16>, vector<32x16xbf16>, vector<64x16xf32> -> vector<64x16xf32>
    %c0_4 = arith.constant 0 : index
    %c0_5 = arith.constant 0 : index
    %5 = vector.load %arg3[%c0_4, %c0_5] : memref<1x16xf32, #tpu.memory_space<vmem>>, vector<1x16xf32>
    %6 = vector.broadcast %5 : vector<1x16xf32> to vector<64x16xf32>
    %7 = arith.addf %4, %6 : vector<64x16xf32>
    %8 = math.tanh %7 : vector<64x16xf32>
    %9 = vector.shape_cast %8 : vector<64x16xf32> to vector<8x8x16xf32>
    %c0_6 = arith.constant 0 : index
    %c0_7 = arith.constant 0 : index
    %10 = vector.load %arg4[%c0_6, %c0_7] : memref<1x16xf32, #tpu.memory_space<vmem>>, vector<1x16xf32>
    %11 = vector.shape_cast %10 : vector<1x16xf32> to vector<1x1x16xf32>
    %12 = vector.broadcast %11 : vector<1x1x16xf32> to vector<8x8x16xf32>
    %13 = arith.mulf %9, %12 : vector<8x8x16xf32>
    %cst_8 = arith.constant dense<0.000000e+00> : vector<8x8xf32>
    %14 = vector.multi_reduction <add>, %13, %cst_8 [2] : vector<8x8x16xf32> to vector<8x8xf32>
    %cst_9 = arith.constant dense<0xFF800000> : vector<8xf32>
    %15 = vector.multi_reduction <maximumf>, %14, %cst_9 [1] : vector<8x8xf32> to vector<8xf32>
    %16 = vector.shape_cast %15 : vector<8xf32> to vector<8x1xf32>
    %17 = vector.broadcast %16 : vector<8x1xf32> to vector<8x8xf32>
    %18 = arith.subf %14, %17 : vector<8x8xf32>
    %19 = math.exp %18 : vector<8x8xf32>
    %cst_10 = arith.constant dense<0.000000e+00> : vector<8xf32>
    %20 = vector.multi_reduction <add>, %19, %cst_10 [1] : vector<8x8xf32> to vector<8xf32>
    %21 = vector.shape_cast %20 : vector<8xf32> to vector<8x1xf32>
    %22 = tpu.reciprocal %21 {approx = true} : vector<8x1xf32> -> vector<8x1xf32>
    %23 = vector.broadcast %22 : vector<8x1xf32> to vector<8x8xf32>
    %24 = arith.mulf %19, %23 : vector<8x8xf32>
    %c0_11 = arith.constant 0 : index
    %c0_12 = arith.constant 0 : index
    %c0_13 = arith.constant 0 : index
    %25 = vector.load %arg1[%c0_11, %c0_12, %c0_13] : memref<8x8x32xf32, #tpu.memory_space<vmem>>, vector<8x8x32xf32>
    %26 = vector.shape_cast %24 : vector<8x8xf32> to vector<8x8x1xf32>
    %27 = vector.broadcast %26 : vector<8x8x1xf32> to vector<8x8x32xf32>
    %28 = arith.mulf %25, %27 : vector<8x8x32xf32>
    %cst_14 = arith.constant dense<0.000000e+00> : vector<8x32xf32>
    %29 = vector.multi_reduction <add>, %28, %cst_14 [1] : vector<8x8x32xf32> to vector<8x32xf32>
    %c0_15 = arith.constant 0 : index
    %c0_16 = arith.constant 0 : index
    %30 = vector.load %arg5[%c0_15, %c0_16] : memref<8x32xf32, #tpu.memory_space<vmem>>, vector<8x32xf32>
    tpu.vector_store %arg5[%c0_15, %c0_16], %29 {strides = array<i32>} : memref<8x32xf32, #tpu.memory_space<vmem>>, vector<8x32xf32>,
    return
  }
  func.func @transform_0(%arg0: i32) -> (i32, i32, i32) {
    %c0_i32 = arith.constant 0 : i32
    %c0_i32_0 = arith.constant 0 : i32
    %c0_i32_1 = arith.constant 0 : i32
    return %arg0, %c0_i32, %c0_i32_0 : i32, i32, i32
  }
  func.func @transform_1(%arg0: i32) -> (i32, i32) {
    %c0_i32 = arith.constant 0 : i32
    %c0_i32_0 = arith.constant 0 : i32
    %c0_i32_1 = arith.constant 0 : i32
    return %c0_i32, %c0_i32_0 : i32, i32
  }
  func.func @transform_2(%arg0: i32) -> (i32, i32) {
    %c0_i32 = arith.constant 0 : i32
    %c0_i32_0 = arith.constant 0 : i32
    %c0_i32_1 = arith.constant 0 : i32
    return %c0_i32, %c0_i32_0 : i32, i32
  }
  func.func @transform_3(%arg0: i32) -> (i32, i32) {
    %c0_i32 = arith.constant 0 : i32
    %c0_i32_0 = arith.constant 0 : i32
    %c0_i32_1 = arith.constant 0 : i32
    return %c0_i32, %c0_i32_0 : i32, i32
  }
  func.func @transform_4(%arg0: i32) -> (i32, i32) {
    %c0_i32 = arith.constant 0 : i32
    %c0_i32_0 = arith.constant 0 : i32
    return %arg0, %c0_i32 : i32, i32
  }
}

</mosaic_0001>

<llo_original>
// kernel: tpu_custom_call.1
$region0: #{tpu_custom_call.1}
  #allocation0 [shape = 'u32[]', space=smem, size = 0x4, offset = 0x4, fixed_abs, tag = 'smem constant byte address 0x4 - core index']
  #allocation1 [shape = 'u32[144,128]{1,0:T(1,128)}', space=vmem, size = 0x12000, scoped, tag = 'internal scratch']
  %s0 = inlined_call_operand.hbm [shape: f32[16,8,32], index: 0, kind: input, shape index: {}]
  %s1 = inlined_call_operand.vmem [shape: bf16[32,16], index: 1, kind: input, shape index: {}]
  %s2 = inlined_call_operand.vmem [shape: f32[1,16], index: 2, kind: input, shape index: {}]
  %s3 = inlined_call_operand.vmem [shape: f32[1,16], index: 3, kind: input, shape index: {}]
  %s4 = inlined_call_operand.hbm [shape: f32[16,32], index: 4, kind: output, shape index: {}]
  %s5 = sld [smem:[#allocation0]]
  $region53: #{tpu_custom_call.1} parent=0
    _
  %s7 = ssub.s32 1, %s5
  %s8 = scalar_select 0, %s7, %s5
  $region1: #{tpu_custom_call.1} parent=0
    #allocation2 [shape = 'u8[65536]{0}', space=vmem, size = 0x10000, scoped, tag = 'input window, operand 0']
    #allocation3 [shape = 's32[2]{0}', space=sflag, size = 0x8, scoped, tag = 'scoped memory for tpu_custom_call.1']
    #allocation4 [shape = 's32[2]{0}', space=sflag, size = 0x8, scoped, tag = 'scoped memory for tpu_custom_call.1']
    #allocation5 [shape = 'u8[8192]{0}', space=vmem, size = 0x2000, scoped, tag = 'output window, operand 0']
    %9 = vsyncpa [#allocation3], 0
    %s10 = scalar_lea.sflag [#allocation3], 1
    %11 = vsyncpa %s10, 0
    %12 = vsyncpa [#allocation4], 0
    %s13 = scalar_lea.sflag [#allocation4], 1
    %14 = vsyncpa %s13, 0
    loop: start=0, step=1, limit=4
    $region2: #{tpu_custom_call.1} parent=1 // loop_pre_header
      _
    $region3: #{tpu_custom_call.1} parent=1 // loop_header
      %s16 = sphi 0, %s20
      %p17 = scmp.ge.s32.totalorder %s16, 4
      %s26 = sphi 0, %s28
      %s29 = sphi 0, %s26
      %s30 = sphi 0, %s29
      %s46 = sphi 0, %s30
      %s50 = sphi 0, %s50
      %s52 = sphi 0, %s50
      %s53 = sphi 0, %s52
      %s67 = sphi 0, %s53
      %s71 = sphi 0, %s71
      %s73 = sphi 0, %s71
      %s74 = sphi 0, %s73
      %s88 = sphi 0, %s74
      %s92 = sphi 0, %s92
      %s94 = sphi 0, %s92
      %s95 = sphi 0, %s94
      %s109 = sphi 0, %s95
      %s115 = sphi 0, %s117
      %s118 = sphi 0, %s115
      %s119 = sphi 0, %s118
      %s135 = sphi 0, %s119
    $region4: #{tpu_custom_call.1} parent=1 // loop_header_branch
      %19 = sbr.rel (%p17) target = $region8
    $region5: #{tpu_custom_call.1} parent=1 // loop_body
      %s21 = ssub.s32 %s16, 1
      %s22 = ssub.s32 %s16, 2
      %s23 = sadd.s32 %s16, 1
      %s24 = ssub.s32 %s16, %s23
      %p25 = scmp.eq.s32.totalorder %s24, 0
      %s27 = sadd.s32 %s26, 1
      %s28 = scalar_select %p25, %s26, %s27
      %p31 = pneg %p25
      %p32 = scmp.eq.s32.totalorder %s16, 1
      %p33 = por %p31, %p32
      %p34 = scmp.ne.s32.totalorder %s26, %s29
      %p35 = scmp.eq.s32.totalorder %s16, 0
      %p36 = por %p34, %p35
      %p37 = scmp.ne.s32.totalorder %s26, %s29
      %p38 = scmp.eq.s32.totalorder %s21, 1
      %p39 = por %p37, %p38
      %p40 = scmp.ne.s32.totalorder %s29, %s30
      %p41 = scmp.eq.s32.totalorder %s21, 0
      %p42 = por %p40, %p41
      %p43 = scmp.ne.s32.totalorder %s29, %s30
      %p44 = scmp.eq.s32.totalorder %s22, 1
      %p45 = por %p43, %p44
      %p47 = scmp.ne.s32.totalorder %s30, %s46
      %p48 = scmp.eq.s32.totalorder %s22, 0
      %p49 = por %p47, %p48
      %s51 = sadd.s32 %s50, 1
      %p54 = scmp.eq.s32.totalorder %s16, 1
      %p55 = scmp.ne.s32.totalorder %s50, %s52
      %p56 = scmp.eq.s32.totalorder %s16, 0
      %p57 = por %p55, %p56
      %p58 = scmp.ne.s32.totalorder %s50, %s52
      %p59 = scmp.eq.s32.totalorder %s21, 1
      %p60 = por %p58, %p59
      %p61 = scmp.ne.s32.totalorder %s52, %s53
      %p62 = scmp.eq.s32.totalorder %s21, 0
      %p63 = por %p61, %p62
      %p64 = scmp.ne.s32.totalorder %s52, %s53
      %p65 = scmp.eq.s32.totalorder %s22, 1
      %p66 = por %p64, %p65
      %p68 = scmp.ne.s32.totalorder %s53, %s67
      %p69 = scmp.eq.s32.totalorder %s22, 0
      %p70 = por %p68, %p69
      %s72 = sadd.s32 %s71, 1
      %p75 = scmp.eq.s32.totalorder %s16, 1
      %p76 = scmp.ne.s32.totalorder %s71, %s73
      %p77 = scmp.eq.s32.totalorder %s16, 0
      %p78 = por %p76, %p77
      %p79 = scmp.ne.s32.totalorder %s71, %s73
      %p80 = scmp.eq.s32.totalorder %s21, 1
      %p81 = por %p79, %p80
      %p82 = scmp.ne.s32.totalorder %s73, %s74
      %p83 = scmp.eq.s32.totalorder %s21, 0
      %p84 = por %p82, %p83
      %p85 = scmp.ne.s32.totalorder %s73, %s74
      %p86 = scmp.eq.s32.totalorder %s22, 1
      %p87 = por %p85, %p86
      %p89 = scmp.ne.s32.totalorder %s74, %s88
      %p90 = scmp.eq.s32.totalorder %s22, 0
      %p91 = por %p89, %p90
      %s93 = sadd.s32 %s92, 1
      %p96 = scmp.eq.s32.totalorder %s16, 1
      %p97 = scmp.ne.s32.totalorder %s92, %s94
      %p98 = scmp.eq.s32.totalorder %s16, 0
      %p99 = por %p97, %p98
      %p100 = scmp.ne.s32.totalorder %s92, %s94
      %p101 = scmp.eq.s32.totalorder %s21, 1
      %p102 = por %p100, %p101
      %p103 = scmp.ne.s32.totalorder %s94, %s95
      %p104 = scmp.eq.s32.totalorder %s21, 0
      %p105 = por %p103, %p104
      %p106 = scmp.ne.s32.totalorder %s94, %s95
      %p107 = scmp.eq.s32.totalorder %s22, 1
      %p108 = por %p106, %p107
      %p110 = scmp.ne.s32.totalorder %s95, %s109
      %p111 = scmp.eq.s32.totalorder %s22, 0
      %p112 = por %p110, %p111
      %s113 = ssub.s32 %s16, %s23
      %p114 = scmp.eq.s32.totalorder %s113, 0
      %s116 = sadd.s32 %s115, 1
      %s117 = scalar_select %p114, %s115, %s116
      %p120 = pneg %p114
      %p121 = scmp.eq.s32.totalorder %s16, 1
      %p122 = por %p120, %p121
      %p123 = scmp.ne.s32.totalorder %s115, %s118
      %p124 = scmp.eq.s32.totalorder %s16, 0
      %p125 = por %p123, %p124
      %p126 = scmp.ne.s32.totalorder %s115, %s118
      %p127 = scmp.eq.s32.totalorder %s21, 1
      %p128 = por %p126, %p127
      %p129 = scmp.ne.s32.totalorder %s118, %s119
      %p130 = scmp.eq.s32.totalorder %s21, 0
      %p131 = por %p129, %p130
      %p132 = scmp.ne.s32.totalorder %s118, %s119
      %p133 = scmp.eq.s32.totalorder %s22, 1
      %p134 = por %p132, %p133
      %p136 = scmp.ne.s32.totalorder %s119, %s135
      %p137 = scmp.eq.s32.totalorder %s22, 0
      %p138 = por %p136, %p137
      %p139 = scmp.le.s32.totalorder 1, %s16
      %p140 = scmp.lt.s32.totalorder %s16, 3
      %p141 = pnand %p139, %p140
      %p142 = pneg %p141
      // Predicated region
      $region9: #{tpu_custom_call.1} parent=5 // pred_check
        _
      $region10: #{tpu_custom_call.1} parent=5 // pred_check_branch
        %144 = sbr.rel (%p141) target = $region12
      $region11: #{tpu_custom_call.1} parent=5 // pred_region
        %s145 = ssub.s32 %s16, 1
        // Predicated region
        $region13: #{tpu_custom_call.1} parent=11 // pred_check
          %p146 = pneg %p63
        $region14: #{tpu_custom_call.1} parent=11 // pred_check_branch
          %148 = sbr.rel (%p146) target = $region16
        $region15: #{tpu_custom_call.1} parent=11 // pred_region
          _
        $region16: #{tpu_custom_call.1} parent=11 // pred_fallthru
          _
        // Predicated region
        $region17: #{tpu_custom_call.1} parent=11 // pred_check
          %p149 = pneg %p84
        $region18: #{tpu_custom_call.1} parent=11 // pred_check_branch
          %151 = sbr.rel (%p149) target = $region20
        $region19: #{tpu_custom_call.1} parent=11 // pred_region
          _
        $region20: #{tpu_custom_call.1} parent=11 // pred_fallthru
          _
        // Predicated region
        $region21: #{tpu_custom_call.1} parent=11 // pred_check
          %p152 = pneg %p105
        $region22: #{tpu_custom_call.1} parent=11 // pred_check_branch
          %154 = sbr.rel (%p152) target = $region24
        $region23: #{tpu_custom_call.1} parent=11 // pred_region
          _
        $region24: #{tpu_custom_call.1} parent=11 // pred_fallthru
          _
      $region12: #{tpu_custom_call.1} parent=5 // pred_fallthru
        _
      %p155 = scmp.lt.s32.totalorder %s16, 2
      // Predicated region
      $region25: #{tpu_custom_call.1} parent=5 // pred_check
        %p156 = pneg %p155
      $region26: #{tpu_custom_call.1} parent=5 // pred_check_branch
        %158 = sbr.rel (%p156) target = $region28
      $region27: #{tpu_custom_call.1} parent=5 // pred_region
        // Predicated region
        $region29: #{tpu_custom_call.1} parent=27 // pred_check
          %p159 = pneg %p36
        $region30: #{tpu_custom_call.1} parent=27 // pred_check_branch
          %161 = sbr.rel (%p159) target = $region32
        $region31: #{tpu_custom_call.1} parent=27 // pred_region
          %s162 = sand.u32 %s26, 1
          %s163 = scalar_lea.sflag [#allocation3], %s162
          %s164 = sand.u32 %s26, 1
          %s165 = smul.addr %s164, 64
          %s166 = scalar_lea.vmem [#allocation2], %s165
          %s167 = smul.u32 8, %s16
          %s169 = ssub.s32 1024, 1024
          %170 = vsyncadd %s163, %s169
          %s171 = smul.addr %s167, 128
          %s172 = scalar_lea.hbm %s0, %s171
          %s173 = sshll.u32 %s166, 4
          %s174 = int_to_ptr.vmem [resolvable:$true] %s173
          %179 = dma.hbm_to_vmem [thread:$0]  %s172, 1024, %s174, %s163, 128, 128, 8
        $region32: #{tpu_custom_call.1} parent=27 // pred_fallthru
          _
      $region28: #{tpu_custom_call.1} parent=5 // pred_fallthru
        _
      %p180 = scmp.le.s32.totalorder 1, %s16
      %p181 = scmp.lt.s32.totalorder %s16, 3
      %p182 = pnand %p180, %p181
      %p183 = pneg %p182
      // Predicated region
      $region33: #{tpu_custom_call.1} parent=5 // pred_check
        _
      $region34: #{tpu_custom_call.1} parent=5 // pred_check_branch
        %185 = sbr.rel (%p182) target = $region36
      $region35: #{tpu_custom_call.1} parent=5 // pred_region
        %s186 = ssub.s32 %s16, 1
        %s187 = sand.u32 %s29, 1
        %s188 = scalar_lea.sflag [#allocation3], %s187
        %s189 = sand.u32 %s29, 1
        %s190 = smul.addr %s189, 64
        %s191 = scalar_lea.vmem [#allocation2], %s190
        // Predicated region
        $region37: #{tpu_custom_call.1} parent=35 // pred_check
          %p192 = pneg %p42
        $region38: #{tpu_custom_call.1} parent=35 // pred_check_branch
          %194 = sbr.rel (%p192) target = $region40
        $region39: #{tpu_custom_call.1} parent=35 // pred_region
          %195 = dma.done %s188, 1024
        $region40: #{tpu_custom_call.1} parent=35 // pred_fallthru
          _
        %s196 = sand.u32 %s29, 1
        %s197 = scalar_lea.sflag [#allocation3], %s196
        %s198 = sand.u32 %s29, 1
        %s199 = smul.addr %s198, 64
        %s200 = scalar_lea.vmem [#allocation2], %s199
        %p201 = pneg %p42
        %p202 = pneg %p39
        %p203 = pneg %p63
        %p204 = pneg %p60
        %p205 = pneg %p84
        %p206 = pneg %p81
        %p207 = pneg %p105
        %p208 = pneg %p102
        %p209 = pneg %p131
        %p210 = pneg %p128
        %s211 = sand.u32 %s118, 1
        %s212 = scalar_lea.sflag [#allocation4], %s211
        %s213 = sand.u32 %s118, 1
        %s214 = smul.addr %s213, 8
        %s215 = scalar_lea.vmem [#allocation5], %s214
        %s216 = smul.u32 8, %s21
        %v218 = vld [vmem:[%s191] sm:$0xff]
        %v219 = vld [vmem:[%s191 + $0x8] sm:$0xff]
        %v220 = vld [vmem:[%s191 + $0x10] sm:$0xff]
        %v221 = vld [vmem:[%s191 + $0x18] sm:$0xff]
        %v222 = vld [vmem:[%s191 + $0x20] sm:$0xff]
        %v223 = vld [vmem:[%s191 + $0x28] sm:$0xff]
        %v224 = vld [vmem:[%s191 + $0x30] sm:$0xff]
        %v225 = vld [vmem:[%s191 + $0x38] sm:$0xff]
        %v226 = vpack.c.bf16 %v219, %v218
        %v227 = vpack.c.bf16 %v221, %v220
        %v228 = vpack.c.bf16 %v223, %v222
        %v229 = vpack.c.bf16 %v225, %v224
        %v230 = vld [vmem:[%s1] sm:$0xf]
        %v231 = vld [vmem:[%s1 + $0x4] sm:$0xf]
        %v232 = vld [vmem:[%s1 + $0x8] sm:$0xf]
        %v233 = vld [vmem:[%s1 + $0xc] sm:$0xf]
        %v234 = vld [vmem:[%s2] sm:$0x1]
        %v236 = vlaneseq
        %v237 = vshrl.u32 %v236, 7
        %v238 = vsub.s32 0, %v237
        %v239 = vrot.slane %v234, %v238
        %v245 = vunpack.c.l.b16 %v230
        %v246 = vunpack.c.l.b16 %v231
        %v247 = vunpack.c.l.b16 %v232
        %v248 = vunpack.c.l.b16 %v233
        %v249 = vpack.c.b16 %v246, %v245
        %v250 = vpack.c.b16 %v248, %v247
        %vm253 = vcmask 261120
        %v255 = vsel %vm253, %v226, 0
        %v258 = vsel %vm253, %v227, 0
        %v261 = vsel %vm253, %v228, 0
        %v264 = vsel %vm253, %v229, 0
        %266 = vmatprep.subr.bf16.mxu0 0
        %267 = vmatpush1.bf16.msra.mxu0 0
        %268 = vmatprep.subr.bf16.mxu0 0
        %269 = vmatpush1.bf16.msra.mxu0 0
        %270 = vmatprep.subr.bf16.mxu0 0
        %271 = vmatpush1.bf16.msra.mxu0 0
        %272 = vmatprep.subr.bf16.mxu0 0
        %273 = vmatpush1.bf16.msra.mxu0 0
        %274 = vmatprep.subr.bf16.mxu0 0
        %275 = vmatpush1.bf16.msra.mxu0 0
        %276 = vmatprep.subr.bf16.mxu0 0
        %277 = vmatpush1.bf16.msra.mxu0 0
        %278 = vmatprep.subr.bf16.mxu0 0
        %279 = vmatpush1.bf16.msra.mxu0 %v250
        %280 = vmatprep.subr.bf16.mxu0 0
        %281 = vmatpush1.bf16.msra.mxu0 %v249
        %282 = vmatprep.subr.bf16.mxu0 0
        %283 = vmatpush2.bf16.msra.mxu0 0
        %284 = vmatprep.subr.bf16.mxu0 0
        %285 = vmatpush2.bf16.msra.mxu0 0
        %286 = vmatprep.subr.bf16.mxu0 0
        %287 = vmatpush2.bf16.msra.mxu0 0
        %288 = vmatprep.subr.bf16.mxu0 0
        %289 = vmatpush2.bf16.msra.mxu0 0
        %290 = vmatprep.subr.bf16.mxu0 0
        %291 = vmatpush2.bf16.msra.mxu0 0
        %292 = vmatprep.subr.bf16.mxu0 0
        %293 = vmatpush2.bf16.msra.mxu0 0
        %294 = vmatprep.subr.bf16.mxu0 0
        %295 = vmatpush2.bf16.msra.mxu0 0
        %296 = vmatprep.subr.bf16.mxu0 0
        %297 = vmatpush2.bf16.msra.mxu0 0
        %298 = vmatprep.mubr.bf16.mxu0 0
        %299 = vmatmul.mubr.bf16.gmra.mxu0 %v255
        %v300 = vpop.f32.mrf.mxu0
        %v301 = vadd.f32 %v239, %v300
        %v302 = vpop.f32.mrf.mxu0
        %v303 = vpop.f32.mrf.mxu0
        %v304 = vadd.f32 %v239, %v303
        %v305 = vpop.f32.mrf.mxu0
        %306 = vmatprep.mubr.bf16.mxu0 0
        %307 = vmatmul.mubr.bf16.gmra.mxu0 %v258
        %v308 = vpop.f32.mrf.mxu0
        %v309 = vadd.f32 %v239, %v308
        %v310 = vpop.f32.mrf.mxu0
        %v311 = vpop.f32.mrf.mxu0
        %v312 = vadd.f32 %v239, %v311
        %v313 = vpop.f32.mrf.mxu0
        %314 = vmatprep.mubr.bf16.mxu0 0
        %315 = vmatmul.mubr.bf16.gmra.mxu0 %v261
        %v316 = vpop.f32.mrf.mxu0
        %v317 = vadd.f32 %v239, %v316
        %v318 = vpop.f32.mrf.mxu0
        %v319 = vpop.f32.mrf.mxu0
        %v320 = vadd.f32 %v239, %v319
        %v321 = vpop.f32.mrf.mxu0
        %322 = vmatprep.mubr.bf16.mxu0 0
        %323 = vmatmul.mubr.bf16.gmra.mxu0 %v264
        %v324 = vpop.f32.mrf.mxu0
        %v325 = vadd.f32 %v239, %v324
        %v326 = vpop.f32.mrf.mxu0
        %v327 = vpop.f32.mrf.mxu0
        %v328 = vadd.f32 %v239, %v327
        %v329 = vpop.f32.mrf.mxu0
        %330 = vdwg.mxu0
        %v331 = vtanh.pop %v301
        %v332 = vtanh.pop %v304
        %v333 = vtanh.pop %v309
        %v334 = vtanh.pop %v312
        %v335 = vtanh.pop %v317
        %v336 = vtanh.pop %v320
        %v337 = vtanh.pop %v325
        %v338 = vtanh.pop %v328
        %v339 = vld [vmem:[%s3] sm:$0x1]
        %v341 = vlaneseq
        %v342 = vshrl.u32 %v341, 7
        %v343 = vsub.s32 0, %v342
        %v344 = vrot.slane %v339, %v343
        %v346 = vmul.f32 %v331, %v344
        %v347 = vmul.f32 %v332, %v344
        %v348 = vmul.f32 %v333, %v344
        %v349 = vmul.f32 %v334, %v344
        %v350 = vmul.f32 %v335, %v344
        %v351 = vmul.f32 %v336, %v344
        %v352 = vmul.f32 %v337, %v344
        %v353 = vmul.f32 %v338, %v344
        %vm354 = vcmask 130048
        %v355 = vsel %vm354, %v346, 0.0
        %356 = vadd.xlane.f32.xlu0 %v355
        %v357 = vpop.xlane.xlu0 %356
        %v358 = vsel %vm354, %v347, 0.0
        %359 = vadd.xlane.f32.xlu0 %v358
        %v360 = vpop.xlane.xlu0 %359
        %v361 = vsel %vm354, %v348, 0.0
        %362 = vadd.xlane.f32.xlu0 %v361
        %v363 = vpop.xlane.xlu0 %362
        %v364 = vsel %vm354, %v349, 0.0
        %365 = vadd.xlane.f32.xlu0 %v364
        %v366 = vpop.xlane.xlu0 %365
        %v367 = vsel %vm354, %v350, 0.0
        %368 = vadd.xlane.f32.xlu0 %v367
        %v369 = vpop.xlane.xlu0 %368
        %v370 = vsel %vm354, %v351, 0.0
        %371 = vadd.xlane.f32.xlu0 %v370
        %v372 = vpop.xlane.xlu0 %371
        %v373 = vsel %vm354, %v352, 0.0
        %374 = vadd.xlane.f32.xlu0 %v373
        %v375 = vpop.xlane.xlu0 %374
        %v376 = vsel %vm354, %v353, 0.0
        %377 = vadd.xlane.f32.xlu0 %v376
        %v378 = vpop.xlane.xlu0 %377
        %v387 = vlaneseq
        %v388 = vand.u32 %v387, 127
        %v389 = vlaneseq
        %v390 = vshrl.u32 %v389, 7
        %v391 = vsub.s32 %v388, %v390
        %v392 = vrot.slane %v357, %v391
        %v393 = vlaneseq
        %v394 = vshrl.u32 %v393, 7
        %v395 = vsub.s32 %v388, %v394
        %v396 = vrot.slane %v360, %v395
        %v397 = vlaneseq
        %v398 = vshrl.u32 %v397, 7
        %v399 = vsub.s32 %v388, %v398
        %v400 = vrot.slane %v363, %v399
        %v401 = vlaneseq
        %v402 = vshrl.u32 %v401, 7
        %v403 = vsub.s32 %v388, %v402
        %v404 = vrot.slane %v366, %v403
        %v405 = vlaneseq
        %v406 = vshrl.u32 %v405, 7
        %v407 = vsub.s32 %v388, %v406
        %v408 = vrot.slane %v369, %v407
        %v409 = vlaneseq
        %v410 = vshrl.u32 %v409, 7
        %v411 = vsub.s32 %v388, %v410
        %v412 = vrot.slane %v372, %v411
        %v413 = vlaneseq
        %v414 = vshrl.u32 %v413, 7
        %v415 = vsub.s32 %v388, %v414
        %v416 = vrot.slane %v375, %v415
        %v417 = vlaneseq
        %v418 = vshrl.u32 %v417, 7
        %v419 = vsub.s32 %v388, %v418
        %v420 = vrot.slane %v378, %v419
        %vm421 = vcmask 1041409
        %v422 = vsel %vm421, %v396, %v392
        %vm423 = vcmask 1042434
        %v424 = vsel %vm423, %v400, %v422
        %vm425 = vcmask 1043459
        %v426 = vsel %vm425, %v404, %v424
        %vm427 = vcmask 1044484
        %v428 = vsel %vm427, %v408, %v426
        %vm429 = vcmask 1045509
        %v430 = vsel %vm429, %v412, %v428
        %vm431 = vcmask 1046534
        %v432 = vsel %vm431, %v416, %v430
        %vm433 = vcmask 1047559
        %v434 = vsel %vm433, %v420, %v432
        %vm436 = vcmask 64512
        %v437 = vsel %vm436, %v434, -inf
        %438 = vmax.xlane.f32.xlu0 %v437
        %v439 = vpop.xlane.xlu0 %438
        %v441 = vlaneseq
        %v442 = vshrl.u32 %v441, 7
        %v443 = vsub.s32 0, %v442
        %v444 = vrot.slane %v439, %v443
        %v445 = vlaneseq
        %v446 = vshrl.u32 %v445, 7
        %v447 = vsub.s32 1, %v446
        %v448 = vrot.slane %v439, %v447
        %v449 = vlaneseq
        %v450 = vshrl.u32 %v449, 7
        %v451 = vsub.s32 2, %v450
        %v452 = vrot.slane %v439, %v451
        %v453 = vlaneseq
        %v454 = vshrl.u32 %v453, 7
        %v455 = vsub.s32 3, %v454
        %v456 = vrot.slane %v439, %v455
        %v457 = vlaneseq
        %v458 = vshrl.u32 %v457, 7
        %v459 = vsub.s32 4, %v458
        %v460 = vrot.slane %v439, %v459
        %v461 = vlaneseq
        %v462 = vshrl.u32 %v461, 7
        %v463 = vsub.s32 5, %v462
        %v464 = vrot.slane %v439, %v463
        %v465 = vlaneseq
        %v466 = vshrl.u32 %v465, 7
        %v467 = vsub.s32 6, %v466
        %v468 = vrot.slane %v439, %v467
        %v469 = vlaneseq
        %v470 = vshrl.u32 %v469, 7
        %v471 = vsub.s32 7, %v470
        %v472 = vrot.slane %v439, %v471
        %v481 = vsub.f32 %v357, %v444
        %v482 = vsub.f32 %v360, %v448
        %v483 = vsub.f32 %v363, %v452
        %v484 = vsub.f32 %v366, %v456
        %v485 = vsub.f32 %v369, %v460
        %v486 = vsub.f32 %v372, %v464
        %v487 = vsub.f32 %v375, %v468
        %v488 = vsub.f32 %v378, %v472
        %v489 = vmul.f32 %v481, 1.442695
        %v490 = vpow.pop %v489
        %v491 = vmul.f32 %v482, 1.442695
        %v492 = vpow.pop %v491
        %v493 = vmul.f32 %v483, 1.442695
        %v494 = vpow.pop %v493
        %v495 = vmul.f32 %v484, 1.442695
        %v496 = vpow.pop %v495
        %v497 = vmul.f32 %v485, 1.442695
        %v498 = vpow.pop %v497
        %v499 = vmul.f32 %v486, 1.442695
        %v500 = vpow.pop %v499
        %v501 = vmul.f32 %v487, 1.442695
        %v502 = vpow.pop %v501
        %v503 = vmul.f32 %v488, 1.442695
        %v504 = vpow.pop %v503
        %513 = vset.pattern.permute.xlu0 0
        %514 = vperm.xlu0 %513, %v490
        %v515 = vpop.permute.xlu0 %514
        %516 = vset.pattern.permute.xlu0 0
        %517 = vperm.xlu0 %516, %v492
        %v518 = vpop.permute.xlu0 %517
        %519 = vset.pattern.permute.xlu0 0
        %520 = vperm.xlu0 %519, %v494
        %v521 = vpop.permute.xlu0 %520
        %522 = vset.pattern.permute.xlu0 0
        %523 = vperm.xlu0 %522, %v496
        %v524 = vpop.permute.xlu0 %523
        %525 = vset.pattern.permute.xlu0 0
        %526 = vperm.xlu0 %525, %v498
        %v527 = vpop.permute.xlu0 %526
        %528 = vset.pattern.permute.xlu0 0
        %529 = vperm.xlu0 %528, %v500
        %v530 = vpop.permute.xlu0 %529
        %531 = vset.pattern.permute.xlu0 0
        %532 = vperm.xlu0 %531, %v502
        %v533 = vpop.permute.xlu0 %532
        %534 = vset.pattern.permute.xlu0 0
        %535 = vperm.xlu0 %534, %v504
        %v536 = vpop.permute.xlu0 %535
        %v537 = vlaneseq
        %v538 = vshrl.u32 %v537, 7
        %v539 = vsub.s32 %v388, %v538
        %v540 = vrot.slane %v515, %v539
        %v541 = vlaneseq
        %v542 = vshrl.u32 %v541, 7
        %v543 = vsub.s32 %v388, %v542
        %v544 = vrot.slane %v518, %v543
        %v545 = vlaneseq
        %v546 = vshrl.u32 %v545, 7
        %v547 = vsub.s32 %v388, %v546
        %v548 = vrot.slane %v521, %v547
        %v549 = vlaneseq
        %v550 = vshrl.u32 %v549, 7
        %v551 = vsub.s32 %v388, %v550
        %v552 = vrot.slane %v524, %v551
        %v553 = vlaneseq
        %v554 = vshrl.u32 %v553, 7
        %v555 = vsub.s32 %v388, %v554
        %v556 = vrot.slane %v527, %v555
        %v557 = vlaneseq
        %v558 = vshrl.u32 %v557, 7
        %v559 = vsub.s32 %v388, %v558
        %v560 = vrot.slane %v530, %v559
        %v561 = vlaneseq
        %v562 = vshrl.u32 %v561, 7
        %v563 = vsub.s32 %v388, %v562
        %v564 = vrot.slane %v533, %v563
        %v565 = vlaneseq
        %v566 = vshrl.u32 %v565, 7
        %v567 = vsub.s32 %v388, %v566
        %v568 = vrot.slane %v536, %v567
        %v569 = vsel %vm421, %v544, %v540
        %v570 = vsel %vm423, %v548, %v569
        %v571 = vsel %vm425, %v552, %v570
        %v572 = vsel %vm427, %v556, %v571
        %v573 = vsel %vm429, %v560, %v572
        %v574 = vsel %vm431, %v564, %v573
        %v575 = vsel %vm433, %v568, %v574
        %v577 = vsel %vm436, %v575, 0.0
        %578 = vadd.xlane.f32.xlu0 %v577
        %v579 = vpop.xlane.xlu0 %578
        %v580 = vrcp.pop %v579
        %v582 = vlaneseq
        %v583 = vshrl.u32 %v582, 7
        %v584 = vsub.s32 0, %v583
        %v585 = vrot.slane %v580, %v584
        %v586 = vlaneseq
        %v587 = vshrl.u32 %v586, 7
        %v588 = vsub.s32 1, %v587
        %v589 = vrot.slane %v580, %v588
        %v590 = vlaneseq
        %v591 = vshrl.u32 %v590, 7
        %v592 = vsub.s32 2, %v591
        %v593 = vrot.slane %v580, %v592
        %v594 = vlaneseq
        %v595 = vshrl.u32 %v594, 7
        %v596 = vsub.s32 3, %v595
        %v597 = vrot.slane %v580, %v596
        %v598 = vlaneseq
        %v599 = vshrl.u32 %v598, 7
        %v600 = vsub.s32 4, %v599
        %v601 = vrot.slane %v580, %v600
        %v602 = vlaneseq
        %v603 = vshrl.u32 %v602, 7
        %v604 = vsub.s32 5, %v603
        %v605 = vrot.slane %v580, %v604
        %v606 = vlaneseq
        %v607 = vshrl.u32 %v606, 7
        %v608 = vsub.s32 6, %v607
        %v609 = vrot.slane %v580, %v608
        %v610 = vlaneseq
        %v611 = vshrl.u32 %v610, 7
        %v612 = vsub.s32 7, %v611
        %v613 = vrot.slane %v580, %v612
        %v622 = vmul.f32 %v490, %v585
        %v623 = vmul.f32 %v492, %v589
        %v624 = vmul.f32 %v494, %v593
        %v625 = vmul.f32 %v496, %v597
        %v626 = vmul.f32 %v498, %v601
        %v627 = vmul.f32 %v500, %v605
        %v628 = vmul.f32 %v502, %v609
        %v629 = vmul.f32 %v504, %v613
        %631 = vset.pattern.permute.xlu0 0
        %632 = vperm.xlu0 %631, %v622
        %v633 = vpop.permute.xlu0 %632
        %636 = vset.pattern.permute.xlu0 0
        %637 = vperm.xlu0 %636, %v623
        %v638 = vpop.permute.xlu0 %637
        %641 = vset.pattern.permute.xlu0 0
        %642 = vperm.xlu0 %641, %v624
        %v643 = vpop.permute.xlu0 %642
        %646 = vset.pattern.permute.xlu0 0
        %647 = vperm.xlu0 %646, %v625
        %v648 = vpop.permute.xlu0 %647
        %651 = vset.pattern.permute.xlu0 0
        %652 = vperm.xlu0 %651, %v626
        %v653 = vpop.permute.xlu0 %652
        %656 = vset.pattern.permute.xlu0 0
        %657 = vperm.xlu0 %656, %v627
        %v658 = vpop.permute.xlu0 %657
        %661 = vset.pattern.permute.xlu0 0
        %662 = vperm.xlu0 %661, %v628
        %v663 = vpop.permute.xlu0 %662
        %666 = vset.pattern.permute.xlu0 0
        %667 = vperm.xlu0 %666, %v629
        %v668 = vpop.permute.xlu0 %667
        %v670 = vmul.f32 %v218, %v633
        %v671 = vmul.f32 %v219, %v638
        %v672 = vmul.f32 %v220, %v643
        %v673 = vmul.f32 %v221, %v648
        %v674 = vmul.f32 %v222, %v653
        %v675 = vmul.f32 %v223, %v658
        %v676 = vmul.f32 %v224, %v663
        %v677 = vmul.f32 %v225, %v668
        %v678 = vsel %vm253, %v670, 0.0
        %v679 = vrot.slane %v678, 4
        %v680 = vadd.f32 %v678, %v679
        %v681 = vrot.slane %v680, 2
        %v682 = vadd.f32 %v680, %v681
        %v683 = vrot.slane %v682, 1
        %v684 = vadd.f32 %v682, %v683
        %v685 = vsel %vm253, %v671, 0.0
        %v686 = vrot.slane %v685, 4
        %v687 = vadd.f32 %v685, %v686
        %v688 = vrot.slane %v687, 2
        %v689 = vadd.f32 %v687, %v688
        %v690 = vrot.slane %v689, 1
        %v691 = vadd.f32 %v689, %v690
        %v692 = vsel %vm253, %v672, 0.0
        %v693 = vrot.slane %v692, 4
        %v694 = vadd.f32 %v692, %v693
        %v695 = vrot.slane %v694, 2
        %v696 = vadd.f32 %v694, %v695
        %v697 = vrot.slane %v696, 1
        %v698 = vadd.f32 %v696, %v697
        %v699 = vsel %vm253, %v673, 0.0
        %v700 = vrot.slane %v699, 4
        %v701 = vadd.f32 %v699, %v700
        %v702 = vrot.slane %v701, 2
        %v703 = vadd.f32 %v701, %v702
        %v704 = vrot.slane %v703, 1
        %v705 = vadd.f32 %v703, %v704
        %v706 = vsel %vm253, %v674, 0.0
        %v707 = vrot.slane %v706, 4
        %v708 = vadd.f32 %v706, %v707
        %v709 = vrot.slane %v708, 2
        %v710 = vadd.f32 %v708, %v709
        %v711 = vrot.slane %v710, 1
        %v712 = vadd.f32 %v710, %v711
        %v713 = vsel %vm253, %v675, 0.0
        %v714 = vrot.slane %v713, 4
        %v715 = vadd.f32 %v713, %v714
        %v716 = vrot.slane %v715, 2
        %v717 = vadd.f32 %v715, %v716
        %v718 = vrot.slane %v717, 1
        %v719 = vadd.f32 %v717, %v718
        %v720 = vsel %vm253, %v676, 0.0
        %v721 = vrot.slane %v720, 4
        %v722 = vadd.f32 %v720, %v721
        %v723 = vrot.slane %v722, 2
        %v724 = vadd.f32 %v722, %v723
        %v725 = vrot.slane %v724, 1
        %v726 = vadd.f32 %v724, %v725
        %v727 = vsel %vm253, %v677, 0.0
        %v728 = vrot.slane %v727, 4
        %v729 = vadd.f32 %v727, %v728
        %v730 = vrot.slane %v729, 2
        %v731 = vadd.f32 %v729, %v730
        %v732 = vrot.slane %v731, 1
        %v733 = vadd.f32 %v731, %v732
        %v742 = vsel %vm421, %v691, %v684
        %v743 = vsel %vm423, %v698, %v742
        %v744 = vsel %vm425, %v705, %v743
        %v745 = vsel %vm427, %v712, %v744
        %v746 = vsel %vm429, %v719, %v745
        %v747 = vsel %vm431, %v726, %v746
        %v748 = vsel %vm433, %v733, %v747
        %750 = vst.msk [vmem:[%s215] sm:$0xff] %vm253, %v748
        %s751 = sand.u32 %s118, 1
        %s752 = scalar_lea.sflag [#allocation4], %s751
        %s753 = sand.u32 %s118, 1
        %s754 = smul.addr %s753, 8
        %s755 = scalar_lea.vmem [#allocation5], %s754
        // Predicated region
        $region41: #{tpu_custom_call.1} parent=35 // pred_check
          %p756 = pneg %p128
        $region42: #{tpu_custom_call.1} parent=35 // pred_check_branch
          %758 = sbr.rel (%p756) target = $region44
        $region43: #{tpu_custom_call.1} parent=35 // pred_region
          %s760 = ssub.s32 128, 128
          %761 = vsyncadd %s752, %s760
          %s762 = smul.addr %s21, 128
          %s763 = scalar_lea.hbm %s4, %s762
          %s765 = sshll.u32 %s755, 4
          %s766 = int_to_ptr.vmem [resolvable:$true] %s765
          %768 = dma.vmem_to_hbm [thread:$0]  %s766, 128, %s763, %s752
        $region44: #{tpu_custom_call.1} parent=35 // pred_fallthru
          _
      $region36: #{tpu_custom_call.1} parent=5 // pred_fallthru
        _
      %p769 = scmp.le.s32.totalorder 2, %s16
      // Predicated region
      $region45: #{tpu_custom_call.1} parent=5 // pred_check
        %p770 = pneg %p769
      $region46: #{tpu_custom_call.1} parent=5 // pred_check_branch
        %772 = sbr.rel (%p770) target = $region48
      $region47: #{tpu_custom_call.1} parent=5 // pred_region
        %s773 = ssub.s32 %s16, 2
        // Predicated region
        $region49: #{tpu_custom_call.1} parent=47 // pred_check
          %p774 = pneg %p134
        $region50: #{tpu_custom_call.1} parent=47 // pred_check_branch
          %776 = sbr.rel (%p774) target = $region52
        $region51: #{tpu_custom_call.1} parent=47 // pred_region
          %s777 = sand.u32 %s119, 1
          %s778 = scalar_lea.sflag [#allocation4], %s777
          %s779 = sand.u32 %s119, 1
          %s780 = smul.addr %s779, 8
          %s781 = scalar_lea.vmem [#allocation5], %s780
          %782 = dma.done %s778, 128
        $region52: #{tpu_custom_call.1} parent=47 // pred_fallthru
          _
      $region48: #{tpu_custom_call.1} parent=5 // pred_fallthru
        _
    $region6: #{tpu_custom_call.1} parent=1 // loop_footer
      %s20 = sadd.s32 1, %s16
    $region7: #{tpu_custom_call.1} parent=1 // loop_footer_branch
      %15 = sbr.rel target = $region3
    $region8: #{tpu_custom_call.1} parent=1 // loop_exit
      _
    %783 = vsyncpa [#allocation3], 1
    %s784 = scalar_lea.sflag [#allocation3], 1
    %785 = vsyncpa %s784, 1
    %786 = vsyncpa [#allocation4], 1
    %s787 = scalar_lea.sflag [#allocation4], 1
    %788 = vsyncpa %s787, 1

</llo_original>
